<compile_context>
chip_gen: v7x
topology: tpu7x:2x2x1
jax: 0.10.0
libtpu: 0.0.40
codegen_flags: <defaults>
</compile_context>

<pallas_src>
import jax
import jax.numpy as jnp
from jax.experimental import pallas as pl
from jax.experimental.pallas import tpu as pltpu


# ------------------------- configuration -------------------------
LAT_DIM = 32
XYZ_DIM = 3
D_IN = LAT_DIM + XYZ_DIM          # 35
HIDDEN = 64
D1_OUT = HIDDEN - D_IN            # 29 (layer-1 output, latent_in at layer 2)
OUT_PAD = 128                     # lane-dense output slab width
TN = 128                          # batch tile (rows per grid step)
N = 256                           # number of query points in the demo


# --------------------------- kernel -------------------------------
def sdf_decoder_kernel(xin_ref, w0_ref, w1_ref, w2a_ref, w2b_ref,
                       w3_ref, wout_ref, bout_ref, out_ref):
    bf16 = jnp.bfloat16
    xin = xin_ref[...]                                   # (TN, 64) bf16, pre-packed

    # layer 0: Linear(35->64, no bias) + ReLU  (W0 zero-padded to 64 rows)
    h = jnp.maximum(
        jnp.dot(xin, w0_ref[...], preferred_element_type=jnp.float32), 0.0)
    # layer 1: Linear(64->29, no bias) + ReLU  (W1 zero-padded to 64 cols)
    h = jnp.maximum(
        jnp.dot(h.astype(bf16), w1_ref[...],
                preferred_element_type=jnp.float32), 0.0)
    # layer 2: latent_in skip concat -> split matmuls (no in-kernel concat)
    h = jnp.maximum(
        jnp.dot(h.astype(bf16), w2a_ref[...],
                preferred_element_type=jnp.float32)
        + jnp.dot(xin, w2b_ref[...],
                  preferred_element_type=jnp.float32), 0.0)
    # layer 3: Linear(64->64, no bias) + ReLU
    h = jnp.maximum(
        jnp.dot(h.astype(bf16), w3_ref[...],
                preferred_element_type=jnp.float32), 0.0)
    # output layer: Linear(64->1) + bias, written as a lane-dense (TN, 128) slab
    out_ref[...] = (
        jnp.dot(h.astype(bf16), wout_ref[...],
                preferred_element_type=jnp.float32)
        + bout_ref[0]
    )


# ---------------------- wrapper-side packing -----------------------
def pack_params(params):
    """Zero-pad / split / cast the module parameters into kernel layout."""
    w0, w1, w2, w3, wout, bout = params          # (in, out) f32, bout (1,) f32
    bf16 = jnp.bfloat16
    w0p = jnp.zeros((HIDDEN, HIDDEN), jnp.float32).at[:D_IN, :].set(w0)
    w1p = jnp.zeros((HIDDEN, HIDDEN), jnp.float32).at[:, :D1_OUT].set(w1)
    w2a = jnp.zeros((HIDDEN, HIDDEN), jnp.float32).at[:D1_OUT, :].set(w2[:D1_OUT])
    w2b = jnp.zeros((HIDDEN, HIDDEN), jnp.float32).at[:D_IN, :].set(w2[D1_OUT:])
    woutp = jnp.zeros((HIDDEN, OUT_PAD), jnp.float32).at[:, :1].set(wout)
    return (w0p.astype(bf16), w1p.astype(bf16), w2a.astype(bf16),
            w2b.astype(bf16), w3.astype(bf16), woutp.astype(bf16),
            bout.astype(jnp.float32))


def sdf_decoder_forward(lat_vec, xyz, packed, *, tn=TN):
    n = lat_vec.shape[0]
    n_pad = pl.cdiv(n, tn) * tn
    grid = (n_pad // tn,)

    # Pre-pack the input into a single lane-aligned slab:
    #   [lat (32) | (xyz+1)/2 (3) | zeros (29)]  -> (n_pad, 64) bf16
    xin = jnp.zeros((n_pad, HIDDEN), jnp.float32)
    xin = xin.at[:n, :LAT_DIM].set(lat_vec)
    xin = xin.at[:n, LAT_DIM:D_IN].set((xyz + 1.0) / 2.0)
    xin = xin.astype(jnp.bfloat16)

    w0p, w1p, w2a, w2b, w3p, woutp, boutp = packed

    out_slab = pl.pallas_call(
        sdf_decoder_kernel,
        out_shape=jax.ShapeDtypeStruct((n_pad, OUT_PAD), jnp.float32),
        grid_spec=pltpu.PrefetchScalarGridSpec(
            num_scalar_prefetch=0,
            grid=grid,
            in_specs=[
                pl.BlockSpec((tn, HIDDEN), lambda i: (i, 0)),        # packed input tile
                pl.BlockSpec((HIDDEN, HIDDEN), lambda i: (0, 0)),    # W0 (padded)
                pl.BlockSpec((HIDDEN, HIDDEN), lambda i: (0, 0)),    # W1 (padded)
                pl.BlockSpec((HIDDEN, HIDDEN), lambda i: (0, 0)),    # W2a (hidden part)
                pl.BlockSpec((HIDDEN, HIDDEN), lambda i: (0, 0)),    # W2b (skip part)
                pl.BlockSpec((HIDDEN, HIDDEN), lambda i: (0, 0)),    # W3
                pl.BlockSpec((HIDDEN, OUT_PAD), lambda i: (0, 0)),   # Wout (lane-dense pad)
                pl.BlockSpec(memory_space=pltpu.MemorySpace.SMEM),   # bout scalar
            ],
            out_specs=pl.BlockSpec((tn, OUT_PAD), lambda i: (i, 0)),
        ),
        compiler_params=pltpu.CompilerParams(
            dimension_semantics=("parallel",)),
    )(xin, w0p, w1p, w2a, w2b, w3p, woutp, boutp)

    # Only column 0 of the lane-dense slab is the real output.
    return out_slab[:n, :1]


# ------------------- deterministic parameter setup ------------------
def weight_norm_effective(key, out_dim, in_dim):
    """weight_norm'd bias-free Linear weight (PyTorch dim=0), returned (in, out)."""
    v = jax.random.normal(key, (out_dim, in_dim), jnp.float32) * 0.1
    g = jnp.linalg.norm(v, axis=1, keepdims=True)                  # (out, 1)
    w = g * v / (jnp.linalg.norm(v, axis=1, keepdims=True) + 1e-12)
    return jnp.transpose(w)                                        # (in, out)


def make_params(key):
    k0, k1, k2, k3, k4, k5 = jax.random.split(key, 6)
    w0 = weight_norm_effective(k0, HIDDEN, D_IN)        # (35, 64)
    w1 = weight_norm_effective(k1, D1_OUT, HIDDEN)      # (64, 29)
    w2 = weight_norm_effective(k2, HIDDEN, HIDDEN)      # (64, 64)
    w3 = weight_norm_effective(k3, HIDDEN, HIDDEN)      # (64, 64)
    wout = (jax.random.normal(k4, (1, HIDDEN), jnp.float32) * 0.1).T   # (64, 1)
    bout = jax.random.normal(k5, (1,), jnp.float32) * 0.1              # (1,)
    return (w0, w1, w2, w3, wout, bout)


# --------------------------- reference -----------------------------
def reference_forward(lat_vec, xyz, params):
    """Module forward with the same numerics as the kernel (bf16 matmul
    operands, f32 accumulation, f32 elementwise)."""
    w0, w1, w2, w3, wout, bout = params
    bf16 = jnp.bfloat16

    def mm(a, w):
        return jnp.dot(a.astype(bf16), w.astype(bf16),
                       preferred_element_type=jnp.float32)

    xyzp = (xyz + 1.0) / 2.0
    x_input = jnp.concatenate([lat_vec, xyzp], axis=-1)            # (N, 35)
    x = jnp.maximum(mm(x_input, w0), 0.0)
    x = jnp.maximum(mm(x, w1), 0.0)
    x = jnp.maximum(mm(jnp.concatenate([x, x_input], axis=-1), w2), 0.0)
    x = jnp.maximum(mm(x, w3), 0.0)
    return mm(x, wout) + bout[0]


# ----------------------------- main ---------------------------------
if __name__ == "__main__":
    key = jax.random.PRNGKey(0)
    k_lat, k_xyz, k_par = jax.random.split(key, 3)

    lat_vec = jax.random.normal(k_lat, (N, LAT_DIM), jnp.float32)
    xyz = jax.random.uniform(k_xyz, (N, XYZ_DIM), jnp.float32,
                             minval=-1.0, maxval=1.0)
    params = make_params(k_par)
    packed = pack_params(params)

    out = sdf_decoder_forward(lat_vec, xyz, packed)
    out = jax.block_until_ready(out)

    ref = reference_forward(lat_vec, xyz, params)
    assert out.shape == (N, 1)
    assert jnp.allclose(out, ref, atol=1e-3, rtol=1e-3), \
        float(jnp.max(jnp.abs(out - ref)))

    print("KERNEL_OK")
</pallas_src>

<mosaic_0001>
module attributes {stable_mosaic.version = 11 : i64} {
  func.func @sdf_decoder_kernel(%arg0: i32, %arg1: memref<128x64xbf16, #tpu.memory_space<vmem>>, %arg2: memref<64x64xbf16, #tpu.memory_space<vmem>>, %arg3: memref<64x64xbf16, #tpu.memory_space<vmem>>, %arg4: memref<64x64xbf16, #tpu.memory_space<vmem>>, %arg5: memref<64x64xbf16, #tpu.memory_space<vmem>>, %arg6: memref<64x64xbf16, #tpu.memory_space<vmem>>, %arg7: memref<64x128xbf16, #tpu.memory_space<vmem>>, %arg8: memref<1xf32, #tpu.memory_space<smem>>, %arg9: memref<128x128xf32, #tpu.memory_space<vmem>>) attributes {dimension_semantics = [#tpu.dimension_semantics<parallel>], iteration_bounds = array<i64: 2>, scalar_prefetch = 0 : i64, scratch_operands = 0 : i64, tpu.core_type = #tpu.core_type<tc>, window_params = [{transform_indices = @transform_0, window_bounds = array<i64: 128, 64>}, {pipeline_mode = #tpu.pipeline_mode<synchronous>, transform_indices = @transform_1, window_bounds = array<i64: 64, 64>}, {pipeline_mode = #tpu.pipeline_mode<synchronous>, transform_indices = @transform_2, window_bounds = array<i64: 64, 64>}, {pipeline_mode = #tpu.pipeline_mode<synchronous>, transform_indices = @transform_3, window_bounds = array<i64: 64, 64>}, {pipeline_mode = #tpu.pipeline_mode<synchronous>, transform_indices = @transform_4, window_bounds = array<i64: 64, 64>}, {pipeline_mode = #tpu.pipeline_mode<synchronous>, transform_indices = @transform_5, window_bounds = array<i64: 64, 64>}, {pipeline_mode = #tpu.pipeline_mode<synchronous>, transform_indices = @transform_6, window_bounds = array<i64: 64, 128>}, {transform_indices = @transform_7, window_bounds = array<i64: 1>}, {transform_indices = @transform_8, window_bounds = array<i64: 128, 128>}]} {
    %c0 = arith.constant 0 : index
    %c0_0 = arith.constant 0 : index
    %0 = vector.load %arg1[%c0, %c0_0] : memref<128x64xbf16, #tpu.memory_space<vmem>>, vector<128x64xbf16>
    %c0_1 = arith.constant 0 : index
    %c0_2 = arith.constant 0 : index
    %1 = vector.load %arg2[%c0_1, %c0_2] : memref<64x64xbf16, #tpu.memory_space<vmem>>, vector<64x64xbf16>
    %cst = arith.constant dense<0.000000e+00> : vector<128x64xf32>
    %2 = tpu.matmul %0, %1, %cst {dimension_numbers = #tpu.dot_dimension_numbers<[1], [0], [0], [1], [0, 0, 1, 1], [], []>} : vector<128x64xbf16>, vector<64x64xbf16>, vector<128x64xf32> -> vector<128x64xf32>
    %cst_3 = arith.constant 0.000000e+00 : f32
    %3 = vector.broadcast %cst_3 : f32 to vector<128x64xf32>
    %4 = arith.maximumf %2, %3 : vector<128x64xf32>
    %5 = arith.truncf %4 : vector<128x64xf32> to vector<128x64xbf16>
    %c0_4 = arith.constant 0 : index
    %c0_5 = arith.constant 0 : index
    %6 = vector.load %arg3[%c0_4, %c0_5] : memref<64x64xbf16, #tpu.memory_space<vmem>>, vector<64x64xbf16>
    %cst_6 = arith.constant dense<0.000000e+00> : vector<128x64xf32>
    %7 = tpu.matmul %5, %6, %cst_6 {dimension_numbers = #tpu.dot_dimension_numbers<[1], [0], [0], [1], [0, 0, 1, 1], [], []>} : vector<128x64xbf16>, vector<64x64xbf16>, vector<128x64xf32> -> vector<128x64xf32>
    %cst_7 = arith.constant 0.000000e+00 : f32
    %8 = vector.broadcast %cst_7 : f32 to vector<128x64xf32>
    %9 = arith.maximumf %7, %8 : vector<128x64xf32>
    %10 = arith.truncf %9 : vector<128x64xf32> to vector<128x64xbf16>
    %c0_8 = arith.constant 0 : index
    %c0_9 = arith.constant 0 : index
    %11 = vector.load %arg4[%c0_8, %c0_9] : memref<64x64xbf16, #tpu.memory_space<vmem>>, vector<64x64xbf16>
    %cst_10 = arith.constant dense<0.000000e+00> : vector<128x64xf32>
    %12 = tpu.matmul %10, %11, %cst_10 {dimension_numbers = #tpu.dot_dimension_numbers<[1], [0], [0], [1], [0, 0, 1, 1], [], []>} : vector<128x64xbf16>, vector<64x64xbf16>, vector<128x64xf32> -> vector<128x64xf32>
    %c0_11 = arith.constant 0 : index
    %c0_12 = arith.constant 0 : index
    %13 = vector.load %arg5[%c0_11, %c0_12] : memref<64x64xbf16, #tpu.memory_space<vmem>>, vector<64x64xbf16>
    %cst_13 = arith.constant dense<0.000000e+00> : vector<128x64xf32>
    %14 = tpu.matmul %0, %13, %cst_13 {dimension_numbers = #tpu.dot_dimension_numbers<[1], [0], [0], [1], [0, 0, 1, 1], [], []>} : vector<128x64xbf16>, vector<64x64xbf16>, vector<128x64xf32> -> vector<128x64xf32>
    %15 = arith.addf %12, %14 : vector<128x64xf32>
    %cst_14 = arith.constant 0.000000e+00 : f32
    %16 = vector.broadcast %cst_14 : f32 to vector<128x64xf32>
    %17 = arith.maximumf %15, %16 : vector<128x64xf32>
    %18 = arith.truncf %17 : vector<128x64xf32> to vector<128x64xbf16>
    %c0_15 = arith.constant 0 : index
    %c0_16 = arith.constant 0 : index
    %19 = vector.load %arg6[%c0_15, %c0_16] : memref<64x64xbf16, #tpu.memory_space<vmem>>, vector<64x64xbf16>
    %cst_17 = arith.constant dense<0.000000e+00> : vector<128x64xf32>
    %20 = tpu.matmul %18, %19, %cst_17 {dimension_numbers = #tpu.dot_dimension_numbers<[1], [0], [0], [1], [0, 0, 1, 1], [], []>} : vector<128x64xbf16>, vector<64x64xbf16>, vector<128x64xf32> -> vector<128x64xf32>
    %cst_18 = arith.constant 0.000000e+00 : f32
    %21 = vector.broadcast %cst_18 : f32 to vector<128x64xf32>
    %22 = arith.maximumf %20, %21 : vector<128x64xf32>
    %23 = arith.truncf %22 : vector<128x64xf32> to vector<128x64xbf16>
    %c0_19 = arith.constant 0 : index
    %c0_20 = arith.constant 0 : index
    %24 = vector.load %arg7[%c0_19, %c0_20] : memref<64x128xbf16, #tpu.memory_space<vmem>>, vector<64x128xbf16>
    %cst_21 = arith.constant dense<0.000000e+00> : vector<128x128xf32>
    %25 = tpu.matmul %23, %24, %cst_21 {dimension_numbers = #tpu.dot_dimension_numbers<[1], [0], [0], [1], [0, 0, 1, 1], [], []>} : vector<128x64xbf16>, vector<64x128xbf16>, vector<128x128xf32> -> vector<128x128xf32>
    %c0_22 = arith.constant 0 : index
    %26 = memref.load %arg8[%c0_22] : memref<1xf32, #tpu.memory_space<smem>>
    %27 = vector.broadcast %26 : f32 to vector<128x128xf32>
    %28 = arith.addf %25, %27 : vector<128x128xf32>
    %c0_23 = arith.constant 0 : index
    %c0_24 = arith.constant 0 : index
    %29 = vector.load %arg9[%c0_23, %c0_24] : memref<128x128xf32, #tpu.memory_space<vmem>>, vector<128x128xf32>
    tpu.vector_store %arg9[%c0_23, %c0_24], %28 {strides = array<i32>} : memref<128x128xf32, #tpu.memory_space<vmem>>, vector<128x128xf32>,
    return
  }
  func.func @transform_0(%arg0: i32) -> (i32, i32) {
    %c0_i32 = arith.constant 0 : i32
    %c0_i32_0 = arith.constant 0 : i32
    return %arg0, %c0_i32 : i32, i32
  }
  func.func @transform_1(%arg0: i32) -> (i32, i32) {
    %c0_i32 = arith.constant 0 : i32
    %c0_i32_0 = arith.constant 0 : i32
    %c0_i32_1 = arith.constant 0 : i32
    return %c0_i32, %c0_i32_0 : i32, i32
  }
  func.func @transform_2(%arg0: i32) -> (i32, i32) {
    %c0_i32 = arith.constant 0 : i32
    %c0_i32_0 = arith.constant 0 : i32
    %c0_i32_1 = arith.constant 0 : i32
    return %c0_i32, %c0_i32_0 : i32, i32
  }
  func.func @transform_3(%arg0: i32) -> (i32, i32) {
    %c0_i32 = arith.constant 0 : i32
    %c0_i32_0 = arith.constant 0 : i32
    %c0_i32_1 = arith.constant 0 : i32
    return %c0_i32, %c0_i32_0 : i32, i32
  }
  func.func @transform_4(%arg0: i32) -> (i32, i32) {
    %c0_i32 = arith.constant 0 : i32
    %c0_i32_0 = arith.constant 0 : i32
    %c0_i32_1 = arith.constant 0 : i32
    return %c0_i32, %c0_i32_0 : i32, i32
  }
  func.func @transform_5(%arg0: i32) -> (i32, i32) {
    %c0_i32 = arith.constant 0 : i32
    %c0_i32_0 = arith.constant 0 : i32
    %c0_i32_1 = arith.constant 0 : i32
    return %c0_i32, %c0_i32_0 : i32, i32
  }
  func.func @transform_6(%arg0: i32) -> (i32, i32) {
    %c0_i32 = arith.constant 0 : i32
    %c0_i32_0 = arith.constant 0 : i32
    %c0_i32_1 = arith.constant 0 : i32
    return %c0_i32, %c0_i32_0 : i32, i32
  }
  func.func @transform_7(%arg0: i32) -> i32 {
    %c0_i32 = arith.constant 0 : i32
    %c0_i32_0 = arith.constant 0 : i32
    return %c0_i32 : i32
  }
  func.func @transform_8(%arg0: i32) -> (i32, i32) {
    %c0_i32 = arith.constant 0 : i32
    %c0_i32_0 = arith.constant 0 : i32
    return %arg0, %c0_i32 : i32, i32
  }
}

</mosaic_0001>

<llo_original>
// kernel: tpu_custom_call.1
$region0: #{tpu_custom_call.1}
  #allocation0 [shape = 'u32[]', space=smem, size = 0x4, offset = 0x4, fixed_abs, tag = 'smem constant byte address 0x4 - core index']
  #allocation1 [shape = 'u32[144,128]{1,0:T(1,128)}', space=vmem, size = 0x12000, scoped, tag = 'internal scratch']
  #allocation2 [shape = 'f32[1]{0:T(128)S(6)}', space=smem, size = 0x200, scoped, tag = 'scoped memory for tpu_custom_call.1']
  %s0 = inlined_call_operand.vmem [shape: bf16[256,64], index: 0, kind: input, shape index: {}]
  %s1 = inlined_call_operand.vmem [shape: bf16[64,64], index: 1, kind: input, shape index: {}]
  %s2 = inlined_call_operand.vmem [shape: bf16[64,64], index: 2, kind: input, shape index: {}]
  %s3 = inlined_call_operand.vmem [shape: bf16[64,64], index: 3, kind: input, shape index: {}]
  %s4 = inlined_call_operand.vmem [shape: bf16[64,64], index: 4, kind: input, shape index: {}]
  %s5 = inlined_call_operand.vmem [shape: bf16[64,64], index: 5, kind: input, shape index: {}]
  %s6 = inlined_call_operand.vmem [shape: bf16[64,128], index: 6, kind: input, shape index: {}]
  %s7 = inlined_call_operand.<no memory space> [shape: f32[1], index: 7, kind: input, shape index: {}]
  %s8 = inlined_call_operand.hbm [shape: f32[256,128], index: 8, kind: output, shape index: {}]
  %s9 = sld [smem:[#allocation0]]
  $region65: #{tpu_custom_call.1} parent=0
    _
  %s11 = ssub.s32 1, %s9
  %s12 = scalar_select 0, %s11, %s9
  %13 = sst [smem:[#allocation2]] %s7
  $region1: #{tpu_custom_call.1} parent=0
    #allocation3 [shape = 'u8[131072]{0}', space=vmem, size = 0x20000, scoped, tag = 'output window, operand 0']
    #allocation4 [shape = 's32[2]{0}', space=sflag, size = 0x8, scoped, tag = 'scoped memory for tpu_custom_call.1']
    %14 = vsyncpa [#allocation4], 0
    %s15 = scalar_lea.sflag [#allocation4], 1
    %16 = vsyncpa %s15, 0
    loop: start=0, step=1, limit=4
    $region2: #{tpu_custom_call.1} parent=1 // loop_pre_header
      _
    $region3: #{tpu_custom_call.1} parent=1 // loop_header
      %s18 = sphi 0, %s22
      %p19 = scmp.ge.s32.totalorder %s18, 4
      %s28 = sphi 0, %s30
      %s31 = sphi 0, %s28
      %s32 = sphi 0, %s31
      %s48 = sphi 0, %s32
      %s52 = sphi 0, %s52
      %s54 = sphi 0, %s52
      %s55 = sphi 0, %s54
      %s69 = sphi 0, %s55
      %s73 = sphi 0, %s73
      %s75 = sphi 0, %s73
      %s76 = sphi 0, %s75
      %s90 = sphi 0, %s76
      %s94 = sphi 0, %s94
      %s96 = sphi 0, %s94
      %s97 = sphi 0, %s96
      %s111 = sphi 0, %s97
      %s115 = sphi 0, %s115
      %s117 = sphi 0, %s115
      %s118 = sphi 0, %s117
      %s132 = sphi 0, %s118
      %s136 = sphi 0, %s136
      %s138 = sphi 0, %s136
      %s139 = sphi 0, %s138
      %s153 = sphi 0, %s139
      %s157 = sphi 0, %s157
      %s159 = sphi 0, %s157
      %s160 = sphi 0, %s159
      %s174 = sphi 0, %s160
      %s178 = sphi 0, %s178
      %s180 = sphi 0, %s178
      %s181 = sphi 0, %s180
      %s195 = sphi 0, %s181
      %s201 = sphi 0, %s203
      %s204 = sphi 0, %s201
      %s205 = sphi 0, %s204
      %s221 = sphi 0, %s205
    $region4: #{tpu_custom_call.1} parent=1 // loop_header_branch
      %21 = sbr.rel (%p19) target = $region8
    $region5: #{tpu_custom_call.1} parent=1 // loop_body
      %s23 = ssub.s32 %s18, 1
      %s24 = ssub.s32 %s18, 2
      %s25 = sadd.s32 %s18, 1
      %s26 = ssub.s32 %s18, %s25
      %p27 = scmp.eq.s32.totalorder %s26, 0
      %s29 = sadd.s32 %s28, 1
      %s30 = scalar_select %p27, %s28, %s29
      %p33 = pneg %p27
      %p34 = scmp.eq.s32.totalorder %s18, 1
      %p35 = por %p33, %p34
      %p36 = scmp.ne.s32.totalorder %s28, %s31
      %p37 = scmp.eq.s32.totalorder %s18, 0
      %p38 = por %p36, %p37
      %p39 = scmp.ne.s32.totalorder %s28, %s31
      %p40 = scmp.eq.s32.totalorder %s23, 1
      %p41 = por %p39, %p40
      %p42 = scmp.ne.s32.totalorder %s31, %s32
      %p43 = scmp.eq.s32.totalorder %s23, 0
      %p44 = por %p42, %p43
      %p45 = scmp.ne.s32.totalorder %s31, %s32
      %p46 = scmp.eq.s32.totalorder %s24, 1
      %p47 = por %p45, %p46
      %p49 = scmp.ne.s32.totalorder %s32, %s48
      %p50 = scmp.eq.s32.totalorder %s24, 0
      %p51 = por %p49, %p50
      %s53 = sadd.s32 %s52, 1
      %p56 = scmp.eq.s32.totalorder %s18, 1
      %p57 = scmp.ne.s32.totalorder %s52, %s54
      %p58 = scmp.eq.s32.totalorder %s18, 0
      %p59 = por %p57, %p58
      %p60 = scmp.ne.s32.totalorder %s52, %s54
      %p61 = scmp.eq.s32.totalorder %s23, 1
      %p62 = por %p60, %p61
      %p63 = scmp.ne.s32.totalorder %s54, %s55
      %p64 = scmp.eq.s32.totalorder %s23, 0
      %p65 = por %p63, %p64
      %p66 = scmp.ne.s32.totalorder %s54, %s55
      %p67 = scmp.eq.s32.totalorder %s24, 1
      %p68 = por %p66, %p67
      %p70 = scmp.ne.s32.totalorder %s55, %s69
      %p71 = scmp.eq.s32.totalorder %s24, 0
      %p72 = por %p70, %p71
      %s74 = sadd.s32 %s73, 1
      %p77 = scmp.eq.s32.totalorder %s18, 1
      %p78 = scmp.ne.s32.totalorder %s73, %s75
      %p79 = scmp.eq.s32.totalorder %s18, 0
      %p80 = por %p78, %p79
      %p81 = scmp.ne.s32.totalorder %s73, %s75
      %p82 = scmp.eq.s32.totalorder %s23, 1
      %p83 = por %p81, %p82
      %p84 = scmp.ne.s32.totalorder %s75, %s76
      %p85 = scmp.eq.s32.totalorder %s23, 0
      %p86 = por %p84, %p85
      %p87 = scmp.ne.s32.totalorder %s75, %s76
      %p88 = scmp.eq.s32.totalorder %s24, 1
      %p89 = por %p87, %p88
      %p91 = scmp.ne.s32.totalorder %s76, %s90
      %p92 = scmp.eq.s32.totalorder %s24, 0
      %p93 = por %p91, %p92
      %s95 = sadd.s32 %s94, 1
      %p98 = scmp.eq.s32.totalorder %s18, 1
      %p99 = scmp.ne.s32.totalorder %s94, %s96
      %p100 = scmp.eq.s32.totalorder %s18, 0
      %p101 = por %p99, %p100
      %p102 = scmp.ne.s32.totalorder %s94, %s96
      %p103 = scmp.eq.s32.totalorder %s23, 1
      %p104 = por %p102, %p103
      %p105 = scmp.ne.s32.totalorder %s96, %s97
      %p106 = scmp.eq.s32.totalorder %s23, 0
      %p107 = por %p105, %p106
      %p108 = scmp.ne.s32.totalorder %s96, %s97
      %p109 = scmp.eq.s32.totalorder %s24, 1
      %p110 = por %p108, %p109
      %p112 = scmp.ne.s32.totalorder %s97, %s111
      %p113 = scmp.eq.s32.totalorder %s24, 0
      %p114 = por %p112, %p113
      %s116 = sadd.s32 %s115, 1
      %p119 = scmp.eq.s32.totalorder %s18, 1
      %p120 = scmp.ne.s32.totalorder %s115, %s117
      %p121 = scmp.eq.s32.totalorder %s18, 0
      %p122 = por %p120, %p121
      %p123 = scmp.ne.s32.totalorder %s115, %s117
      %p124 = scmp.eq.s32.totalorder %s23, 1
      %p125 = por %p123, %p124
      %p126 = scmp.ne.s32.totalorder %s117, %s118
      %p127 = scmp.eq.s32.totalorder %s23, 0
      %p128 = por %p126, %p127
      %p129 = scmp.ne.s32.totalorder %s117, %s118
      %p130 = scmp.eq.s32.totalorder %s24, 1
      %p131 = por %p129, %p130
      %p133 = scmp.ne.s32.totalorder %s118, %s132
      %p134 = scmp.eq.s32.totalorder %s24, 0
      %p135 = por %p133, %p134
      %s137 = sadd.s32 %s136, 1
      %p140 = scmp.eq.s32.totalorder %s18, 1
      %p141 = scmp.ne.s32.totalorder %s136, %s138
      %p142 = scmp.eq.s32.totalorder %s18, 0
      %p143 = por %p141, %p142
      %p144 = scmp.ne.s32.totalorder %s136, %s138
      %p145 = scmp.eq.s32.totalorder %s23, 1
      %p146 = por %p144, %p145
      %p147 = scmp.ne.s32.totalorder %s138, %s139
      %p148 = scmp.eq.s32.totalorder %s23, 0
      %p149 = por %p147, %p148
      %p150 = scmp.ne.s32.totalorder %s138, %s139
      %p151 = scmp.eq.s32.totalorder %s24, 1
      %p152 = por %p150, %p151
      %p154 = scmp.ne.s32.totalorder %s139, %s153
      %p155 = scmp.eq.s32.totalorder %s24, 0
      %p156 = por %p154, %p155
      %s158 = sadd.s32 %s157, 1
      %p161 = scmp.eq.s32.totalorder %s18, 1
      %p162 = scmp.ne.s32.totalorder %s157, %s159
      %p163 = scmp.eq.s32.totalorder %s18, 0
      %p164 = por %p162, %p163
      %p165 = scmp.ne.s32.totalorder %s157, %s159
      %p166 = scmp.eq.s32.totalorder %s23, 1
      %p167 = por %p165, %p166
      %p168 = scmp.ne.s32.totalorder %s159, %s160
      %p169 = scmp.eq.s32.totalorder %s23, 0
      %p170 = por %p168, %p169
      %p171 = scmp.ne.s32.totalorder %s159, %s160
      %p172 = scmp.eq.s32.totalorder %s24, 1
      %p173 = por %p171, %p172
      %p175 = scmp.ne.s32.totalorder %s160, %s174
      %p176 = scmp.eq.s32.totalorder %s24, 0
      %p177 = por %p175, %p176
      %s179 = sadd.s32 %s178, 1
      %p182 = scmp.eq.s32.totalorder %s18, 1
      %p183 = scmp.ne.s32.totalorder %s178, %s180
      %p184 = scmp.eq.s32.totalorder %s18, 0
      %p185 = por %p183, %p184
      %p186 = scmp.ne.s32.totalorder %s178, %s180
      %p187 = scmp.eq.s32.totalorder %s23, 1
      %p188 = por %p186, %p187
      %p189 = scmp.ne.s32.totalorder %s180, %s181
      %p190 = scmp.eq.s32.totalorder %s23, 0
      %p191 = por %p189, %p190
      %p192 = scmp.ne.s32.totalorder %s180, %s181
      %p193 = scmp.eq.s32.totalorder %s24, 1
      %p194 = por %p192, %p193
      %p196 = scmp.ne.s32.totalorder %s181, %s195
      %p197 = scmp.eq.s32.totalorder %s24, 0
      %p198 = por %p196, %p197
      %s199 = ssub.s32 %s18, %s25
      %p200 = scmp.eq.s32.totalorder %s199, 0
      %s202 = sadd.s32 %s201, 1
      %s203 = scalar_select %p200, %s201, %s202
      %p206 = pneg %p200
      %p207 = scmp.eq.s32.totalorder %s18, 1
      %p208 = por %p206, %p207
      %p209 = scmp.ne.s32.totalorder %s201, %s204
      %p210 = scmp.eq.s32.totalorder %s18, 0
      %p211 = por %p209, %p210
      %p212 = scmp.ne.s32.totalorder %s201, %s204
      %p213 = scmp.eq.s32.totalorder %s23, 1
      %p214 = por %p212, %p213
      %p215 = scmp.ne.s32.totalorder %s204, %s205
      %p216 = scmp.eq.s32.totalorder %s23, 0
      %p217 = por %p215, %p216
      %p218 = scmp.ne.s32.totalorder %s204, %s205
      %p219 = scmp.eq.s32.totalorder %s24, 1
      %p220 = por %p218, %p219
      %p222 = scmp.ne.s32.totalorder %s205, %s221
      %p223 = scmp.eq.s32.totalorder %s24, 0
      %p224 = por %p222, %p223
      %p225 = scmp.le.s32.totalorder 1, %s18
      %p226 = scmp.lt.s32.totalorder %s18, 3
      %p227 = pnand %p225, %p226
      %p228 = pneg %p227
      // Predicated region
      $region9: #{tpu_custom_call.1} parent=5 // pred_check
        _
      $region10: #{tpu_custom_call.1} parent=5 // pred_check_branch
        %230 = sbr.rel (%p227) target = $region12
      $region11: #{tpu_custom_call.1} parent=5 // pred_region
        %s231 = ssub.s32 %s18, 1
        // Predicated region
        $region13: #{tpu_custom_call.1} parent=11 // pred_check
          %p232 = pneg %p65
        $region14: #{tpu_custom_call.1} parent=11 // pred_check_branch
          %234 = sbr.rel (%p232) target = $region16
        $region15: #{tpu_custom_call.1} parent=11 // pred_region
          _
        $region16: #{tpu_custom_call.1} parent=11 // pred_fallthru
          _
        // Predicated region
        $region17: #{tpu_custom_call.1} parent=11 // pred_check
          %p235 = pneg %p86
        $region18: #{tpu_custom_call.1} parent=11 // pred_check_branch
          %237 = sbr.rel (%p235) target = $region20
        $region19: #{tpu_custom_call.1} parent=11 // pred_region
          _
        $region20: #{tpu_custom_call.1} parent=11 // pred_fallthru
          _
        // Predicated region
        $region21: #{tpu_custom_call.1} parent=11 // pred_check
          %p238 = pneg %p107
        $region22: #{tpu_custom_call.1} parent=11 // pred_check_branch
          %240 = sbr.rel (%p238) target = $region24
        $region23: #{tpu_custom_call.1} parent=11 // pred_region
          _
        $region24: #{tpu_custom_call.1} parent=11 // pred_fallthru
          _
        // Predicated region
        $region25: #{tpu_custom_call.1} parent=11 // pred_check
          %p241 = pneg %p128
        $region26: #{tpu_custom_call.1} parent=11 // pred_check_branch
          %243 = sbr.rel (%p241) target = $region28
        $region27: #{tpu_custom_call.1} parent=11 // pred_region
          _
        $region28: #{tpu_custom_call.1} parent=11 // pred_fallthru
          _
        // Predicated region
        $region29: #{tpu_custom_call.1} parent=11 // pred_check
          %p244 = pneg %p149
        $region30: #{tpu_custom_call.1} parent=11 // pred_check_branch
          %246 = sbr.rel (%p244) target = $region32
        $region31: #{tpu_custom_call.1} parent=11 // pred_region
          _
        $region32: #{tpu_custom_call.1} parent=11 // pred_fallthru
          _
        // Predicated region
        $region33: #{tpu_custom_call.1} parent=11 // pred_check
          %p247 = pneg %p170
        $region34: #{tpu_custom_call.1} parent=11 // pred_check_branch
          %249 = sbr.rel (%p247) target = $region36
        $region35: #{tpu_custom_call.1} parent=11 // pred_region
          _
        $region36: #{tpu_custom_call.1} parent=11 // pred_fallthru
          _
        // Predicated region
        $region37: #{tpu_custom_call.1} parent=11 // pred_check
          %p250 = pneg %p191
        $region38: #{tpu_custom_call.1} parent=11 // pred_check_branch
          %252 = sbr.rel (%p250) target = $region40
        $region39: #{tpu_custom_call.1} parent=11 // pred_region
          _
        $region40: #{tpu_custom_call.1} parent=11 // pred_fallthru
          _
      $region12: #{tpu_custom_call.1} parent=5 // pred_fallthru
        _
      %p253 = scmp.lt.s32.totalorder %s18, 2
      // Predicated region
      $region41: #{tpu_custom_call.1} parent=5 // pred_check
        %p254 = pneg %p253
      $region42: #{tpu_custom_call.1} parent=5 // pred_check_branch
        %256 = sbr.rel (%p254) target = $region44
      $region43: #{tpu_custom_call.1} parent=5 // pred_region
        // Predicated region
        $region45: #{tpu_custom_call.1} parent=43 // pred_check
          %p257 = pneg %p38
        $region46: #{tpu_custom_call.1} parent=43 // pred_check_branch
          %259 = sbr.rel (%p257) target = $region48
        $region47: #{tpu_custom_call.1} parent=43 // pred_region
          %s260 = smul.u32 16, %s18
          %p261 = scmp.lt.s32.totalorder %s260, 31
          %s262 = scalar_select %p261, %s260, 31
          %s263 = smul.addr %s262, 4
          %s264 = scalar_lea.vmem %s0, %s263
          %s265 = smul.u32 16, %s18
        $region48: #{tpu_custom_call.1} parent=43 // pred_fallthru
          _
      $region44: #{tpu_custom_call.1} parent=5 // pred_fallthru
        _
      %p266 = scmp.le.s32.totalorder 1, %s18
      %p267 = scmp.lt.s32.totalorder %s18, 3
      %p268 = pnand %p266, %p267
      %p269 = pneg %p268
      // Predicated region
      $region49: #{tpu_custom_call.1} parent=5 // pred_check
        _
      $region50: #{tpu_custom_call.1} parent=5 // pred_check_branch
        %271 = sbr.rel (%p268) target = $region52
      $region51: #{tpu_custom_call.1} parent=5 // pred_region
        %s272 = ssub.s32 %s18, 1
        %s273 = smul.u32 16, %s23
        %p274 = scmp.lt.s32.totalorder %s273, 31
        %s275 = scalar_select %p274, %s273, 31
        %s276 = smul.addr %s275, 4
        %s277 = scalar_lea.vmem %s0, %s276
        %p278 = pneg %p44
        %p279 = pneg %p41
        %p280 = pneg %p65
        %p281 = pneg %p62
        %p282 = pneg %p86
        %p283 = pneg %p83
        %p284 = pneg %p107
        %p285 = pneg %p104
        %p286 = pneg %p128
        %p287 = pneg %p125
        %p288 = pneg %p149
        %p289 = pneg %p146
        %p290 = pneg %p170
        %p291 = pneg %p167
        %p292 = pneg %p191
        %p293 = pneg %p188
        %p294 = pneg %p217
        %p295 = pneg %p214
        %s296 = sand.u32 %s204, 1
        %s297 = scalar_lea.sflag [#allocation4], %s296
        %s298 = sand.u32 %s204, 1
        %s299 = smul.addr %s298, 128
        %s300 = scalar_lea.vmem [#allocation3], %s299
        %s301 = smul.u32 16, %s23
        %p302 = scmp.lt.s32.totalorder %s301, 31
        %s303 = scalar_select %p302, %s301, 31
        %s304 = smul.addr %s303, 4
        %s305 = scalar_lea.vmem %s0, %s304
        %s306 = smul.u32 16, %s23
        %s307 = smul.u32 16, %s23
        %v309 = vld [vmem:[%s305] sm:$0xf]
        %v310 = vld [vmem:[%s305 + $0x4] sm:$0xf]
        %v311 = vld [vmem:[%s305 + $0x8] sm:$0xf]
        %v312 = vld [vmem:[%s305 + $0xc] sm:$0xf]
        %v313 = vld [vmem:[%s305 + $0x10] sm:$0xf]
        %v314 = vld [vmem:[%s305 + $0x14] sm:$0xf]
        %v315 = vld [vmem:[%s305 + $0x18] sm:$0xf]
        %v316 = vld [vmem:[%s305 + $0x1c] sm:$0xf]
        %v317 = vld [vmem:[%s305 + $0x20] sm:$0xf]
        %v318 = vld [vmem:[%s305 + $0x24] sm:$0xf]
        %v319 = vld [vmem:[%s305 + $0x28] sm:$0xf]
        %v320 = vld [vmem:[%s305 + $0x2c] sm:$0xf]
        %v321 = vld [vmem:[%s305 + $0x30] sm:$0xf]
        %v322 = vld [vmem:[%s305 + $0x34] sm:$0xf]
        %v323 = vld [vmem:[%s305 + $0x38] sm:$0xf]
        %v324 = vld [vmem:[%s305 + $0x3c] sm:$0xf]
        %v325 = vld [vmem:[%s1] sm:$0xf]
        %v326 = vld [vmem:[%s1 + $0x4] sm:$0xf]
        %v327 = vld [vmem:[%s1 + $0x8] sm:$0xf]
        %v328 = vld [vmem:[%s1 + $0xc] sm:$0xf]
        %v329 = vld [vmem:[%s1 + $0x10] sm:$0xf]
        %v330 = vld [vmem:[%s1 + $0x14] sm:$0xf]
        %v331 = vld [vmem:[%s1 + $0x18] sm:$0xf]
        %v332 = vld [vmem:[%s1 + $0x1c] sm:$0xf]
        %v349 = vunpack.c.l.b16 %v309
        %v350 = vunpack.c.l.b16 %v310
        %v351 = vunpack.c.l.b16 %v311
        %v352 = vunpack.c.l.b16 %v312
        %v353 = vunpack.c.l.b16 %v313
        %v354 = vunpack.c.l.b16 %v314
        %v355 = vunpack.c.l.b16 %v315
        %v356 = vunpack.c.l.b16 %v316
        %v357 = vunpack.c.l.b16 %v317
        %v358 = vunpack.c.l.b16 %v318
        %v359 = vunpack.c.l.b16 %v319
        %v360 = vunpack.c.l.b16 %v320
        %v361 = vunpack.c.l.b16 %v321
        %v362 = vunpack.c.l.b16 %v322
        %v363 = vunpack.c.l.b16 %v323
        %v364 = vunpack.c.l.b16 %v324
        %v365 = vpack.c.b16 %v350, %v349
        %v366 = vpack.c.b16 %v352, %v351
        %v367 = vpack.c.b16 %v354, %v353
        %v368 = vpack.c.b16 %v356, %v355
        %v369 = vpack.c.b16 %v358, %v357
        %v370 = vpack.c.b16 %v360, %v359
        %v371 = vpack.c.b16 %v362, %v361
        %v372 = vpack.c.b16 %v364, %v363
        %v381 = vunpack.c.l.b16 %v325
        %v382 = vunpack.c.l.b16 %v326
        %v383 = vunpack.c.l.b16 %v327
        %v384 = vunpack.c.l.b16 %v328
        %v385 = vunpack.c.l.b16 %v329
        %v386 = vunpack.c.l.b16 %v330
        %v387 = vunpack.c.l.b16 %v331
        %v388 = vunpack.c.l.b16 %v332
        %v389 = vpack.c.b16 %v382, %v381
        %v390 = vpack.c.b16 %v384, %v383
        %v391 = vpack.c.b16 %v386, %v385
        %v392 = vpack.c.b16 %v388, %v387
        %vm397 = vcmask 523264
        %v399 = vsel %vm397, %v365, 0
        %v402 = vsel %vm397, %v366, 0
        %v405 = vsel %vm397, %v367, 0
        %v408 = vsel %vm397, %v368, 0
        %v411 = vsel %vm397, %v369, 0
        %v414 = vsel %vm397, %v370, 0
        %v417 = vsel %vm397, %v371, 0
        %v420 = vsel %vm397, %v372, 0
        %422 = vmatprep.subr.bf16.mxu0 0
        %423 = vmatpush1.bf16.msra.mxu0 %v389
        %424 = vmatprep.subr.bf16.mxu0 0
        %425 = vmatpush1.bf16.msra.mxu0 %v390
        %426 = vmatprep.subr.bf16.mxu0 0
        %427 = vmatpush1.bf16.msra.mxu0 %v391
        %428 = vmatprep.subr.bf16.mxu0 0
        %429 = vmatpush1.bf16.msra.mxu0 %v392
        %430 = vmatprep.subr.bf16.mxu0 0
        %431 = vmatpush1.bf16.msra.mxu0 0
        %432 = vmatprep.subr.bf16.mxu0 0
        %433 = vmatpush1.bf16.msra.mxu0 0
        %434 = vmatprep.subr.bf16.mxu0 0
        %435 = vmatpush1.bf16.msra.mxu0 0
        %436 = vmatprep.subr.bf16.mxu0 0
        %437 = vmatpush1.bf16.msra.mxu0 0
        %438 = vmatprep.subr.bf16.mxu0 0
        %439 = vmatpush1.bf16.msra.mxu0 0
        %440 = vmatprep.subr.bf16.mxu0 0
        %441 = vmatpush1.bf16.msra.mxu0 0
        %442 = vmatprep.subr.bf16.mxu0 0
        %443 = vmatpush1.bf16.msra.mxu0 0
        %444 = vmatprep.subr.bf16.mxu0 0
        %445 = vmatpush1.bf16.msra.mxu0 0
        %446 = vmatprep.subr.bf16.mxu0 0
        %447 = vmatpush1.bf16.msra.mxu0 0
        %448 = vmatprep.subr.bf16.mxu0 0
        %449 = vmatpush1.bf16.msra.mxu0 0
        %450 = vmatprep.subr.bf16.mxu0 0
        %451 = vmatpush1.bf16.msra.mxu0 0
        %452 = vmatprep.subr.bf16.mxu0 0
        %453 = vmatpush1.bf16.msra.mxu0 0
        %454 = vmatprep.mubr.bf16.mxu0 0
        %455 = vmatmul.mubr.bf16.gmra.mrb[0].mxu0 %v399
        %v456 = vpop.f32.mrb[0].mxu0
        %v457 = vadd.f32 0.0, %v456
        %v458 = vpop.f32.mrb[0].mxu0
        %v459 = vpop.f32.mrb[0].mxu0
        %v460 = vadd.f32 0.0, %v459
        %v461 = vpop.f32.mrb[0].mxu0
        %462 = vmatprep.mubr.bf16.mxu0 0
        %463 = vmatmul.mubr.bf16.gmra.mrb[0].mxu0 %v402
        %v464 = vpop.f32.mrb[0].mxu0
        %v465 = vadd.f32 0.0, %v464
        %v466 = vpop.f32.mrb[0].mxu0
        %v467 = vpop.f32.mrb[0].mxu0
        %v468 = vadd.f32 0.0, %v467
        %v469 = vpop.f32.mrb[0].mxu0
        %470 = vmatprep.mubr.bf16.mxu0 0
        %471 = vmatmul.mubr.bf16.gmra.mrb[0].mxu0 %v405
        %v472 = vpop.f32.mrb[0].mxu0
        %v473 = vadd.f32 0.0, %v472
        %v474 = vpop.f32.mrb[0].mxu0
        %v475 = vpop.f32.mrb[0].mxu0
        %v476 = vadd.f32 0.0, %v475
        %v477 = vpop.f32.mrb[0].mxu0
        %478 = vmatprep.mubr.bf16.mxu0 0
        %479 = vmatmul.mubr.bf16.gmra.mrb[0].mxu0 %v408
        %v480 = vpop.f32.mrb[0].mxu0
        %v481 = vadd.f32 0.0, %v480
        %v482 = vpop.f32.mrb[0].mxu0
        %v483 = vpop.f32.mrb[0].mxu0
        %v484 = vadd.f32 0.0, %v483
        %v485 = vpop.f32.mrb[0].mxu0
        %486 = vmatprep.mubr.bf16.mxu0 0
        %487 = vmatmul.mubr.bf16.gmra.mrb[0].mxu0 %v411
        %v488 = vpop.f32.mrb[0].mxu0
        %v489 = vadd.f32 0.0, %v488
        %v490 = vpop.f32.mrb[0].mxu0
        %v491 = vpop.f32.mrb[0].mxu0
        %v492 = vadd.f32 0.0, %v491
        %v493 = vpop.f32.mrb[0].mxu0
        %494 = vmatprep.mubr.bf16.mxu0 0
        %495 = vmatmul.mubr.bf16.gmra.mrb[0].mxu0 %v414
        %v496 = vpop.f32.mrb[0].mxu0
        %v497 = vadd.f32 0.0, %v496
        %v498 = vpop.f32.mrb[0].mxu0
        %v499 = vpop.f32.mrb[0].mxu0
        %v500 = vadd.f32 0.0, %v499
        %v501 = vpop.f32.mrb[0].mxu0
        %502 = vmatprep.mubr.bf16.mxu0 0
        %503 = vmatmul.mubr.bf16.gmra.mrb[0].mxu0 %v417
        %v504 = vpop.f32.mrb[0].mxu0
        %v505 = vadd.f32 0.0, %v504
        %v506 = vpop.f32.mrb[0].mxu0
        %v507 = vpop.f32.mrb[0].mxu0
        %v508 = vadd.f32 0.0, %v507
        %v509 = vpop.f32.mrb[0].mxu0
        %510 = vmatprep.mubr.bf16.mxu0 0
        %511 = vmatmul.mubr.bf16.gmra.mrb[0].mxu0 %v420
        %v512 = vpop.f32.mrb[0].mxu0
        %v513 = vadd.f32 0.0, %v512
        %v514 = vpop.f32.mrb[0].mxu0
        %v515 = vpop.f32.mrb[0].mxu0
        %v516 = vadd.f32 0.0, %v515
        %v517 = vpop.f32.mrb[0].mxu0
        %518 = vdwg.mxu0
        %v519 = vmax.f32 %v457, 0.0
        %v520 = vmax.f32 %v460, 0.0
        %v521 = vmax.f32 %v465, 0.0
        %v522 = vmax.f32 %v468, 0.0
        %v523 = vmax.f32 %v473, 0.0
        %v524 = vmax.f32 %v476, 0.0
        %v525 = vmax.f32 %v481, 0.0
        %v526 = vmax.f32 %v484, 0.0
        %v527 = vmax.f32 %v489, 0.0
        %v528 = vmax.f32 %v492, 0.0
        %v529 = vmax.f32 %v497, 0.0
        %v530 = vmax.f32 %v500, 0.0
        %v531 = vmax.f32 %v505, 0.0
        %v532 = vmax.f32 %v508, 0.0
        %v533 = vmax.f32 %v513, 0.0
        %v534 = vmax.f32 %v516, 0.0
        %v535 = vpack.c.bf16 %v520, %v519
        %v536 = vpack.c.bf16 %v522, %v521
        %v537 = vpack.c.bf16 %v524, %v523
        %v538 = vpack.c.bf16 %v526, %v525
        %v539 = vpack.c.bf16 %v528, %v527
        %v540 = vpack.c.bf16 %v530, %v529
        %v541 = vpack.c.bf16 %v532, %v531
        %v542 = vpack.c.bf16 %v534, %v533
        %v543 = vld [vmem:[%s2] sm:$0xf]
        %v544 = vld [vmem:[%s2 + $0x4] sm:$0xf]
        %v545 = vld [vmem:[%s2 + $0x8] sm:$0xf]
        %v546 = vld [vmem:[%s2 + $0xc] sm:$0xf]
        %v547 = vld [vmem:[%s2 + $0x10] sm:$0xf]
        %v548 = vld [vmem:[%s2 + $0x14] sm:$0xf]
        %v549 = vld [vmem:[%s2 + $0x18] sm:$0xf]
        %v550 = vld [vmem:[%s2 + $0x1c] sm:$0xf]
        %v559 = vunpack.c.l.b16 %v543
        %v560 = vunpack.c.l.b16 %v544
        %v561 = vunpack.c.l.b16 %v545
        %v562 = vunpack.c.l.b16 %v546
        %v563 = vunpack.c.l.b16 %v547
        %v564 = vunpack.c.l.b16 %v548
        %v565 = vunpack.c.l.b16 %v549
        %v566 = vunpack.c.l.b16 %v550
        %v567 = vpack.c.b16 %v560, %v559
        %v568 = vpack.c.b16 %v562, %v561
        %v569 = vpack.c.b16 %v564, %v563
        %v570 = vpack.c.b16 %v566, %v565
        %v576 = vsel %vm397, %v535, 0
        %v579 = vsel %vm397, %v536, 0
        %v582 = vsel %vm397, %v537, 0
        %v585 = vsel %vm397, %v538, 0
        %v588 = vsel %vm397, %v539, 0
        %v591 = vsel %vm397, %v540, 0
        %v594 = vsel %vm397, %v541, 0
        %v597 = vsel %vm397, %v542, 0
        %599 = vmatprep.subr.bf16.mxu0 0
        %600 = vmatpush1.bf16.msra.mxu0 %v567
        %601 = vmatprep.subr.bf16.mxu0 0
        %602 = vmatpush1.bf16.msra.mxu0 %v568
        %603 = vmatprep.subr.bf16.mxu0 0
        %604 = vmatpush1.bf16.msra.mxu0 %v569
        %605 = vmatprep.subr.bf16.mxu0 0
        %606 = vmatpush1.bf16.msra.mxu0 %v570
        %607 = vmatprep.subr.bf16.mxu0 0
        %608 = vmatpush1.bf16.msra.mxu0 0
        %609 = vmatprep.subr.bf16.mxu0 0
        %610 = vmatpush1.bf16.msra.mxu0 0
        %611 = vmatprep.subr.bf16.mxu0 0
        %612 = vmatpush1.bf16.msra.mxu0 0
        %613 = vmatprep.subr.bf16.mxu0 0
        %614 = vmatpush1.bf16.msra.mxu0 0
        %615 = vmatprep.subr.bf16.mxu0 0
        %616 = vmatpush1.bf16.msra.mxu0 0
        %617 = vmatprep.subr.bf16.mxu0 0
        %618 = vmatpush1.bf16.msra.mxu0 0
        %619 = vmatprep.subr.bf16.mxu0 0
        %620 = vmatpush1.bf16.msra.mxu0 0
        %621 = vmatprep.subr.bf16.mxu0 0
        %622 = vmatpush1.bf16.msra.mxu0 0
        %623 = vmatprep.subr.bf16.mxu0 0
        %624 = vmatpush1.bf16.msra.mxu0 0
        %625 = vmatprep.subr.bf16.mxu0 0
        %626 = vmatpush1.bf16.msra.mxu0 0
        %627 = vmatprep.subr.bf16.mxu0 0
        %628 = vmatpush1.bf16.msra.mxu0 0
        %629 = vmatprep.subr.bf16.mxu0 0
        %630 = vmatpush1.bf16.msra.mxu0 0
        %631 = vmatprep.mubr.bf16.mxu0 0
        %632 = vmatmul.mubr.bf16.gmra.mrb[0].mxu0 %v576
        %v633 = vpop.f32.mrb[0].mxu0
        %v634 = vadd.f32 0.0, %v633
        %v635 = vpop.f32.mrb[0].mxu0
        %v636 = vpop.f32.mrb[0].mxu0
        %v637 = vadd.f32 0.0, %v636
        %v638 = vpop.f32.mrb[0].mxu0
        %639 = vmatprep.mubr.bf16.mxu0 0
        %640 = vmatmul.mubr.bf16.gmra.mrb[0].mxu0 %v579
        %v641 = vpop.f32.mrb[0].mxu0
        %v642 = vadd.f32 0.0, %v641
        %v643 = vpop.f32.mrb[0].mxu0
        %v644 = vpop.f32.mrb[0].mxu0
        %v645 = vadd.f32 0.0, %v644
        %v646 = vpop.f32.mrb[0].mxu0
        %647 = vmatprep.mubr.bf16.mxu0 0
        %648 = vmatmul.mubr.bf16.gmra.mrb[0].mxu0 %v582
        %v649 = vpop.f32.mrb[0].mxu0
        %v650 = vadd.f32 0.0, %v649
        %v651 = vpop.f32.mrb[0].mxu0
        %v652 = vpop.f32.mrb[0].mxu0
        %v653 = vadd.f32 0.0, %v652
        %v654 = vpop.f32.mrb[0].mxu0
        %655 = vmatprep.mubr.bf16.mxu0 0
        %656 = vmatmul.mubr.bf16.gmra.mrb[0].mxu0 %v585
        %v657 = vpop.f32.mrb[0].mxu0
        %v658 = vadd.f32 0.0, %v657
        %v659 = vpop.f32.mrb[0].mxu0
        %v660 = vpop.f32.mrb[0].mxu0
        %v661 = vadd.f32 0.0, %v660
        %v662 = vpop.f32.mrb[0].mxu0
        %663 = vmatprep.mubr.bf16.mxu0 0
        %664 = vmatmul.mubr.bf16.gmra.mrb[0].mxu0 %v588
        %v665 = vpop.f32.mrb[0].mxu0
        %v666 = vadd.f32 0.0, %v665
        %v667 = vpop.f32.mrb[0].mxu0
        %v668 = vpop.f32.mrb[0].mxu0
        %v669 = vadd.f32 0.0, %v668
        %v670 = vpop.f32.mrb[0].mxu0
        %671 = vmatprep.mubr.bf16.mxu0 0
        %672 = vmatmul.mubr.bf16.gmra.mrb[0].mxu0 %v591
        %v673 = vpop.f32.mrb[0].mxu0
        %v674 = vadd.f32 0.0, %v673
        %v675 = vpop.f32.mrb[0].mxu0
        %v676 = vpop.f32.mrb[0].mxu0
        %v677 = vadd.f32 0.0, %v676
        %v678 = vpop.f32.mrb[0].mxu0
        %679 = vmatprep.mubr.bf16.mxu0 0
        %680 = vmatmul.mubr.bf16.gmra.mrb[0].mxu0 %v594
        %v681 = vpop.f32.mrb[0].mxu0
        %v682 = vadd.f32 0.0, %v681
        %v683 = vpop.f32.mrb[0].mxu0
        %v684 = vpop.f32.mrb[0].mxu0
        %v685 = vadd.f32 0.0, %v684
        %v686 = vpop.f32.mrb[0].mxu0
        %687 = vmatprep.mubr.bf16.mxu0 0
        %688 = vmatmul.mubr.bf16.gmra.mrb[0].mxu0 %v597
        %v689 = vpop.f32.mrb[0].mxu0
        %v690 = vadd.f32 0.0, %v689
        %v691 = vpop.f32.mrb[0].mxu0
        %v692 = vpop.f32.mrb[0].mxu0
        %v693 = vadd.f32 0.0, %v692
        %v694 = vpop.f32.mrb[0].mxu0
        %695 = vdwg.mxu0
        %v696 = vmax.f32 %v634, 0.0
        %v697 = vmax.f32 %v637, 0.0
        %v698 = vmax.f32 %v642, 0.0
        %v699 = vmax.f32 %v645, 0.0
        %v700 = vmax.f32 %v650, 0.0
        %v701 = vmax.f32 %v653, 0.0
        %v702 = vmax.f32 %v658, 0.0
        %v703 = vmax.f32 %v661, 0.0
        %v704 = vmax.f32 %v666, 0.0
        %v705 = vmax.f32 %v669, 0.0
        %v706 = vmax.f32 %v674, 0.0
        %v707 = vmax.f32 %v677, 0.0
        %v708 = vmax.f32 %v682, 0.0
        %v709 = vmax.f32 %v685, 0.0
        %v710 = vmax.f32 %v690, 0.0
        %v711 = vmax.f32 %v693, 0.0
        %v712 = vpack.c.bf16 %v697, %v696
        %v713 = vpack.c.bf16 %v699, %v698
        %v714 = vpack.c.bf16 %v701, %v700
        %v715 = vpack.c.bf16 %v703, %v702
        %v716 = vpack.c.bf16 %v705, %v704
        %v717 = vpack.c.bf16 %v707, %v706
        %v718 = vpack.c.bf16 %v709, %v708
        %v719 = vpack.c.bf16 %v711, %v710
        %v720 = vld [vmem:[%s3] sm:$0xf]
        %v721 = vld [vmem:[%s3 + $0x4] sm:$0xf]
        %v722 = vld [vmem:[%s3 + $0x8] sm:$0xf]
        %v723 = vld [vmem:[%s3 + $0xc] sm:$0xf]
        %v724 = vld [vmem:[%s3 + $0x10] sm:$0xf]
        %v725 = vld [vmem:[%s3 + $0x14] sm:$0xf]
        %v726 = vld [vmem:[%s3 + $0x18] sm:$0xf]
        %v727 = vld [vmem:[%s3 + $0x1c] sm:$0xf]
        %v728 = vld [vmem:[%s4] sm:$0xf]
        %v729 = vld [vmem:[%s4 + $0x4] sm:$0xf]
        %v730 = vld [vmem:[%s4 + $0x8] sm:$0xf]
        %v731 = vld [vmem:[%s4 + $0xc] sm:$0xf]
        %v732 = vld [vmem:[%s4 + $0x10] sm:$0xf]
        %v733 = vld [vmem:[%s4 + $0x14] sm:$0xf]
        %v734 = vld [vmem:[%s4 + $0x18] sm:$0xf]
        %v735 = vld [vmem:[%s4 + $0x1c] sm:$0xf]
        %v744 = vunpack.c.l.b16 %v728
        %v745 = vunpack.c.l.b16 %v729
        %v746 = vunpack.c.l.b16 %v730
        %v747 = vunpack.c.l.b16 %v731
        %v748 = vunpack.c.l.b16 %v732
        %v749 = vunpack.c.l.b16 %v733
        %v750 = vunpack.c.l.b16 %v734
        %v751 = vunpack.c.l.b16 %v735
        %v752 = vpack.c.b16 %v745, %v744
        %v753 = vpack.c.b16 %v747, %v746
        %v754 = vpack.c.b16 %v749, %v748
        %v755 = vpack.c.b16 %v751, %v750
        %760 = vmatprep.subr.bf16.mxu0 0
        %761 = vmatpush1.bf16.msra.mxu0 %v752
        %762 = vmatprep.subr.bf16.mxu0 0
        %763 = vmatpush1.bf16.msra.mxu0 %v753
        %764 = vmatprep.subr.bf16.mxu0 0
        %765 = vmatpush1.bf16.msra.mxu0 %v754
        %766 = vmatprep.subr.bf16.mxu0 0
        %767 = vmatpush1.bf16.msra.mxu0 %v755
        %768 = vmatprep.subr.bf16.mxu0 0
        %769 = vmatpush1.bf16.msra.mxu0 0
        %770 = vmatprep.subr.bf16.mxu0 0
        %771 = vmatpush1.bf16.msra.mxu0 0
        %772 = vmatprep.subr.bf16.mxu0 0
        %773 = vmatpush1.bf16.msra.mxu0 0
        %774 = vmatprep.subr.bf16.mxu0 0
        %775 = vmatpush1.bf16.msra.mxu0 0
        %776 = vmatprep.subr.bf16.mxu0 0
        %777 = vmatpush1.bf16.msra.mxu0 0
        %778 = vmatprep.subr.bf16.mxu0 0
        %779 = vmatpush1.bf16.msra.mxu0 0
        %780 = vmatprep.subr.bf16.mxu0 0
        %781 = vmatpush1.bf16.msra.mxu0 0
        %782 = vmatprep.subr.bf16.mxu0 0
        %783 = vmatpush1.bf16.msra.mxu0 0
        %784 = vmatprep.subr.bf16.mxu0 0
        %785 = vmatpush1.bf16.msra.mxu0 0
        %786 = vmatprep.subr.bf16.mxu0 0
        %787 = vmatpush1.bf16.msra.mxu0 0
        %788 = vmatprep.subr.bf16.mxu0 0
        %789 = vmatpush1.bf16.msra.mxu0 0
        %790 = vmatprep.subr.bf16.mxu0 0
        %791 = vmatpush1.bf16.msra.mxu0 0
        %792 = vmatprep.mubr.bf16.mxu0 0
        %793 = vmatmul.mubr.bf16.gmra.mrb[0].mxu0 %v399
        %v794 = vpop.f32.mrb[0].mxu0
        %v795 = vadd.f32 0.0, %v794
        %v796 = vpop.f32.mrb[0].mxu0
        %v797 = vpop.f32.mrb[0].mxu0
        %v798 = vadd.f32 0.0, %v797
        %v799 = vpop.f32.mrb[0].mxu0
        %800 = vmatprep.mubr.bf16.mxu0 0
        %801 = vmatmul.mubr.bf16.gmra.mrb[0].mxu0 %v402
        %v802 = vpop.f32.mrb[0].mxu0
        %v803 = vadd.f32 0.0, %v802
        %v804 = vpop.f32.mrb[0].mxu0
        %v805 = vpop.f32.mrb[0].mxu0
        %v806 = vadd.f32 0.0, %v805
        %v807 = vpop.f32.mrb[0].mxu0
        %808 = vmatprep.mubr.bf16.mxu0 0
        %809 = vmatmul.mubr.bf16.gmra.mrb[0].mxu0 %v405
        %v810 = vpop.f32.mrb[0].mxu0
        %v811 = vadd.f32 0.0, %v810
        %v812 = vpop.f32.mrb[0].mxu0
        %v813 = vpop.f32.mrb[0].mxu0
        %v814 = vadd.f32 0.0, %v813
        %v815 = vpop.f32.mrb[0].mxu0
        %816 = vmatprep.mubr.bf16.mxu0 0
        %817 = vmatmul.mubr.bf16.gmra.mrb[0].mxu0 %v408
        %v818 = vpop.f32.mrb[0].mxu0
        %v819 = vadd.f32 0.0, %v818
        %v820 = vpop.f32.mrb[0].mxu0
        %v821 = vpop.f32.mrb[0].mxu0
        %v822 = vadd.f32 0.0, %v821
        %v823 = vpop.f32.mrb[0].mxu0
        %824 = vmatprep.mubr.bf16.mxu0 0
        %825 = vmatmul.mubr.bf16.gmra.mrb[0].mxu0 %v411
        %v826 = vpop.f32.mrb[0].mxu0
        %v827 = vadd.f32 0.0, %v826
        %v828 = vpop.f32.mrb[0].mxu0
        %v829 = vpop.f32.mrb[0].mxu0
        %v830 = vadd.f32 0.0, %v829
        %v831 = vpop.f32.mrb[0].mxu0
        %832 = vmatprep.mubr.bf16.mxu0 0
        %833 = vmatmul.mubr.bf16.gmra.mrb[0].mxu0 %v414
        %v834 = vpop.f32.mrb[0].mxu0
        %v835 = vadd.f32 0.0, %v834
        %v836 = vpop.f32.mrb[0].mxu0
        %v837 = vpop.f32.mrb[0].mxu0
        %v838 = vadd.f32 0.0, %v837
        %v839 = vpop.f32.mrb[0].mxu0
        %840 = vmatprep.mubr.bf16.mxu0 0
        %841 = vmatmul.mubr.bf16.gmra.mrb[0].mxu0 %v417
        %v842 = vpop.f32.mrb[0].mxu0
        %v843 = vadd.f32 0.0, %v842
        %v844 = vpop.f32.mrb[0].mxu0
        %v845 = vpop.f32.mrb[0].mxu0
        %v846 = vadd.f32 0.0, %v845
        %v847 = vpop.f32.mrb[0].mxu0
        %848 = vmatprep.mubr.bf16.mxu0 0
        %849 = vmatmul.mubr.bf16.gmra.mrb[0].mxu0 %v420
        %v850 = vpop.f32.mrb[0].mxu0
        %v851 = vadd.f32 0.0, %v850
        %v852 = vpop.f32.mrb[0].mxu0
        %v853 = vpop.f32.mrb[0].mxu0
        %v854 = vadd.f32 0.0, %v853
        %v855 = vpop.f32.mrb[0].mxu0
        %856 = vdwg.mxu0
        %v865 = vunpack.c.l.b16 %v720
        %v866 = vunpack.c.l.b16 %v721
        %v867 = vunpack.c.l.b16 %v722
        %v868 = vunpack.c.l.b16 %v723
        %v869 = vunpack.c.l.b16 %v724
        %v870 = vunpack.c.l.b16 %v725
        %v871 = vunpack.c.l.b16 %v726
        %v872 = vunpack.c.l.b16 %v727
        %v873 = vpack.c.b16 %v866, %v865
        %v874 = vpack.c.b16 %v868, %v867
        %v875 = vpack.c.b16 %v870, %v869
        %v876 = vpack.c.b16 %v872, %v871
        %v882 = vsel %vm397, %v712, 0
        %v885 = vsel %vm397, %v713, 0
        %v888 = vsel %vm397, %v714, 0
        %v891 = vsel %vm397, %v715, 0
        %v894 = vsel %vm397, %v716, 0
        %v897 = vsel %vm397, %v717, 0
        %v900 = vsel %vm397, %v718, 0
        %v903 = vsel %vm397, %v719, 0
        %905 = vmatprep.subr.bf16.mxu0 0
        %906 = vmatpush1.bf16.msra.mxu0 %v873
        %907 = vmatprep.subr.bf16.mxu0 0
        %908 = vmatpush1.bf16.msra.mxu0 %v874
        %909 = vmatprep.subr.bf16.mxu0 0
        %910 = vmatpush1.bf16.msra.mxu0 %v875
        %911 = vmatprep.subr.bf16.mxu0 0
        %912 = vmatpush1.bf16.msra.mxu0 %v876
        %913 = vmatprep.subr.bf16.mxu0 0
        %914 = vmatpush1.bf16.msra.mxu0 0
        %915 = vmatprep.subr.bf16.mxu0 0
        %916 = vmatpush1.bf16.msra.mxu0 0
        %917 = vmatprep.subr.bf16.mxu0 0
        %918 = vmatpush1.bf16.msra.mxu0 0
        %919 = vmatprep.subr.bf16.mxu0 0
        %920 = vmatpush1.bf16.msra.mxu0 0
        %921 = vmatprep.subr.bf16.mxu0 0
        %922 = vmatpush1.bf16.msra.mxu0 0
        %923 = vmatprep.subr.bf16.mxu0 0
        %924 = vmatpush1.bf16.msra.mxu0 0
        %925 = vmatprep.subr.bf16.mxu0 0
        %926 = vmatpush1.bf16.msra.mxu0 0
        %927 = vmatprep.subr.bf16.mxu0 0
        %928 = vmatpush1.bf16.msra.mxu0 0
        %929 = vmatprep.subr.bf16.mxu0 0
        %930 = vmatpush1.bf16.msra.mxu0 0
        %931 = vmatprep.subr.bf16.mxu0 0
        %932 = vmatpush1.bf16.msra.mxu0 0
        %933 = vmatprep.subr.bf16.mxu0 0
        %934 = vmatpush1.bf16.msra.mxu0 0
        %935 = vmatprep.subr.bf16.mxu0 0
        %936 = vmatpush1.bf16.msra.mxu0 0
        %937 = vmatprep.mubr.bf16.mxu0 0
        %938 = vmatmul.mubr.bf16.gmra.mrb[0].mxu0 %v882
        %v939 = vpop.f32.mrb[0].mxu0
        %v940 = vadd.f32 %v795, %v939
        %v941 = vpop.f32.mrb[0].mxu0
        %v942 = vpop.f32.mrb[0].mxu0
        %v943 = vadd.f32 %v798, %v942
        %v944 = vpop.f32.mrb[0].mxu0
        %945 = vmatprep.mubr.bf16.mxu0 0
        %946 = vmatmul.mubr.bf16.gmra.mrb[0].mxu0 %v885
        %v947 = vpop.f32.mrb[0].mxu0
        %v948 = vadd.f32 %v803, %v947
        %v949 = vpop.f32.mrb[0].mxu0
        %v950 = vpop.f32.mrb[0].mxu0
        %v951 = vadd.f32 %v806, %v950
        %v952 = vpop.f32.mrb[0].mxu0
        %953 = vmatprep.mubr.bf16.mxu0 0
        %954 = vmatmul.mubr.bf16.gmra.mrb[0].mxu0 %v888
        %v955 = vpop.f32.mrb[0].mxu0
        %v956 = vadd.f32 %v811, %v955
        %v957 = vpop.f32.mrb[0].mxu0
        %v958 = vpop.f32.mrb[0].mxu0
        %v959 = vadd.f32 %v814, %v958
        %v960 = vpop.f32.mrb[0].mxu0
        %961 = vmatprep.mubr.bf16.mxu0 0
        %962 = vmatmul.mubr.bf16.gmra.mrb[0].mxu0 %v891
        %v963 = vpop.f32.mrb[0].mxu0
        %v964 = vadd.f32 %v819, %v963
        %v965 = vpop.f32.mrb[0].mxu0
        %v966 = vpop.f32.mrb[0].mxu0
        %v967 = vadd.f32 %v822, %v966
        %v968 = vpop.f32.mrb[0].mxu0
        %969 = vmatprep.mubr.bf16.mxu0 0
        %970 = vmatmul.mubr.bf16.gmra.mrb[0].mxu0 %v894
        %v971 = vpop.f32.mrb[0].mxu0
        %v972 = vadd.f32 %v827, %v971
        %v973 = vpop.f32.mrb[0].mxu0
        %v974 = vpop.f32.mrb[0].mxu0
        %v975 = vadd.f32 %v830, %v974
        %v976 = vpop.f32.mrb[0].mxu0
        %977 = vmatprep.mubr.bf16.mxu0 0
        %978 = vmatmul.mubr.bf16.gmra.mrb[0].mxu0 %v897
        %v979 = vpop.f32.mrb[0].mxu0
        %v980 = vadd.f32 %v835, %v979
        %v981 = vpop.f32.mrb[0].mxu0
        %v982 = vpop.f32.mrb[0].mxu0
        %v983 = vadd.f32 %v838, %v982
        %v984 = vpop.f32.mrb[0].mxu0
        %985 = vmatprep.mubr.bf16.mxu0 0
        %986 = vmatmul.mubr.bf16.gmra.mrb[0].mxu0 %v900
        %v987 = vpop.f32.mrb[0].mxu0
        %v988 = vadd.f32 %v843, %v987
        %v989 = vpop.f32.mrb[0].mxu0
        %v990 = vpop.f32.mrb[0].mxu0
        %v991 = vadd.f32 %v846, %v990
        %v992 = vpop.f32.mrb[0].mxu0
        %993 = vmatprep.mubr.bf16.mxu0 0
        %994 = vmatmul.mubr.bf16.gmra.mrb[0].mxu0 %v903
        %v995 = vpop.f32.mrb[0].mxu0
        %v996 = vadd.f32 %v851, %v995
        %v997 = vpop.f32.mrb[0].mxu0
        %v998 = vpop.f32.mrb[0].mxu0
        %v999 = vadd.f32 %v854, %v998
        %v1000 = vpop.f32.mrb[0].mxu0
        %1001 = vdwg.mxu0
        %v1002 = vmax.f32 %v940, 0.0
        %v1003 = vmax.f32 %v943, 0.0
        %v1004 = vmax.f32 %v948, 0.0
        %v1005 = vmax.f32 %v951, 0.0
        %v1006 = vmax.f32 %v956, 0.0
        %v1007 = vmax.f32 %v959, 0.0
        %v1008 = vmax.f32 %v964, 0.0
        %v1009 = vmax.f32 %v967, 0.0
        %v1010 = vmax.f32 %v972, 0.0
        %v1011 = vmax.f32 %v975, 0.0
        %v1012 = vmax.f32 %v980, 0.0
        %v1013 = vmax.f32 %v983, 0.0
        %v1014 = vmax.f32 %v988, 0.0
        %v1015 = vmax.f32 %v991, 0.0
        %v1016 = vmax.f32 %v996, 0.0
        %v1017 = vmax.f32 %v999, 0.0
        %v1018 = vpack.c.bf16 %v1003, %v1002
        %v1019 = vpack.c.bf16 %v1005, %v1004
        %v1020 = vpack.c.bf16 %v1007, %v1006
        %v1021 = vpack.c.bf16 %v1009, %v1008
        %v1022 = vpack.c.bf16 %v1011, %v1010
        %v1023 = vpack.c.bf16 %v1013, %v1012
        %v1024 = vpack.c.bf16 %v1015, %v1014
        %v1025 = vpack.c.bf16 %v1017, %v1016
        %v1026 = vld [vmem:[%s5] sm:$0xf]
        %v1027 = vld [vmem:[%s5 + $0x4] sm:$0xf]
        %v1028 = vld [vmem:[%s5 + $0x8] sm:$0xf]
        %v1029 = vld [vmem:[%s5 + $0xc] sm:$0xf]
        %v1030 = vld [vmem:[%s5 + $0x10] sm:$0xf]
        %v1031 = vld [vmem:[%s5 + $0x14] sm:$0xf]
        %v1032 = vld [vmem:[%s5 + $0x18] sm:$0xf]
        %v1033 = vld [vmem:[%s5 + $0x1c] sm:$0xf]
        %v1042 = vunpack.c.l.b16 %v1026
        %v1043 = vunpack.c.l.b16 %v1027
        %v1044 = vunpack.c.l.b16 %v1028
        %v1045 = vunpack.c.l.b16 %v1029
        %v1046 = vunpack.c.l.b16 %v1030
        %v1047 = vunpack.c.l.b16 %v1031
        %v1048 = vunpack.c.l.b16 %v1032
        %v1049 = vunpack.c.l.b16 %v1033
        %v1050 = vpack.c.b16 %v1043, %v1042
        %v1051 = vpack.c.b16 %v1045, %v1044
        %v1052 = vpack.c.b16 %v1047, %v1046
        %v1053 = vpack.c.b16 %v1049, %v1048
        %v1059 = vsel %vm397, %v1018, 0
        %v1062 = vsel %vm397, %v1019, 0
        %v1065 = vsel %vm397, %v1020, 0
        %v1068 = vsel %vm397, %v1021, 0
        %v1071 = vsel %vm397, %v1022, 0
        %v1074 = vsel %vm397, %v1023, 0
        %v1077 = vsel %vm397, %v1024, 0
        %v1080 = vsel %vm397, %v1025, 0
        %1082 = vmatprep.subr.bf16.mxu0 0
        %1083 = vmatpush1.bf16.msra.mxu0 %v1050
        %1084 = vmatprep.subr.bf16.mxu0 0
        %1085 = vmatpush1.bf16.msra.mxu0 %v1051
        %1086 = vmatprep.subr.bf16.mxu0 0
        %1087 = vmatpush1.bf16.msra.mxu0 %v1052
        %1088 = vmatprep.subr.bf16.mxu0 0
        %1089 = vmatpush1.bf16.msra.mxu0 %v1053
        %1090 = vmatprep.subr.bf16.mxu0 0
        %1091 = vmatpush1.bf16.msra.mxu0 0
        %1092 = vmatprep.subr.bf16.mxu0 0
        %1093 = vmatpush1.bf16.msra.mxu0 0
        %1094 = vmatprep.subr.bf16.mxu0 0
        %1095 = vmatpush1.bf16.msra.mxu0 0
        %1096 = vmatprep.subr.bf16.mxu0 0
        %1097 = vmatpush1.bf16.msra.mxu0 0
        %1098 = vmatprep.subr.bf16.mxu0 0
        %1099 = vmatpush1.bf16.msra.mxu0 0
        %1100 = vmatprep.subr.bf16.mxu0 0
        %1101 = vmatpush1.bf16.msra.mxu0 0
        %1102 = vmatprep.subr.bf16.mxu0 0
        %1103 = vmatpush1.bf16.msra.mxu0 0
        %1104 = vmatprep.subr.bf16.mxu0 0
        %1105 = vmatpush1.bf16.msra.mxu0 0
        %1106 = vmatprep.subr.bf16.mxu0 0
        %1107 = vmatpush1.bf16.msra.mxu0 0
        %1108 = vmatprep.subr.bf16.mxu0 0
        %1109 = vmatpush1.bf16.msra.mxu0 0
        %1110 = vmatprep.subr.bf16.mxu0 0
        %1111 = vmatpush1.bf16.msra.mxu0 0
        %1112 = vmatprep.subr.bf16.mxu0 0
        %1113 = vmatpush1.bf16.msra.mxu0 0
        %1114 = vmatprep.mubr.bf16.mxu0 0
        %1115 = vmatmul.mubr.bf16.gmra.mrb[0].mxu0 %v1059
        %v1116 = vpop.f32.mrb[0].mxu0
        %v1117 = vadd.f32 0.0, %v1116
        %v1118 = vpop.f32.mrb[0].mxu0
        %v1119 = vpop.f32.mrb[0].mxu0
        %v1120 = vadd.f32 0.0, %v1119
        %v1121 = vpop.f32.mrb[0].mxu0
        %1122 = vmatprep.mubr.bf16.mxu0 0
        %1123 = vmatmul.mubr.bf16.gmra.mrb[0].mxu0 %v1062
        %v1124 = vpop.f32.mrb[0].mxu0
        %v1125 = vadd.f32 0.0, %v1124
        %v1126 = vpop.f32.mrb[0].mxu0
        %v1127 = vpop.f32.mrb[0].mxu0
        %v1128 = vadd.f32 0.0, %v1127
        %v1129 = vpop.f32.mrb[0].mxu0
        %1130 = vmatprep.mubr.bf16.mxu0 0
        %1131 = vmatmul.mubr.bf16.gmra.mrb[0].mxu0 %v1065
        %v1132 = vpop.f32.mrb[0].mxu0
        %v1133 = vadd.f32 0.0, %v1132
        %v1134 = vpop.f32.mrb[0].mxu0
        %v1135 = vpop.f32.mrb[0].mxu0
        %v1136 = vadd.f32 0.0, %v1135
        %v1137 = vpop.f32.mrb[0].mxu0
        %1138 = vmatprep.mubr.bf16.mxu0 0
        %1139 = vmatmul.mubr.bf16.gmra.mrb[0].mxu0 %v1068
        %v1140 = vpop.f32.mrb[0].mxu0
        %v1141 = vadd.f32 0.0, %v1140
        %v1142 = vpop.f32.mrb[0].mxu0
        %v1143 = vpop.f32.mrb[0].mxu0
        %v1144 = vadd.f32 0.0, %v1143
        %v1145 = vpop.f32.mrb[0].mxu0
        %1146 = vmatprep.mubr.bf16.mxu0 0
        %1147 = vmatmul.mubr.bf16.gmra.mrb[0].mxu0 %v1071
        %v1148 = vpop.f32.mrb[0].mxu0
        %v1149 = vadd.f32 0.0, %v1148
        %v1150 = vpop.f32.mrb[0].mxu0
        %v1151 = vpop.f32.mrb[0].mxu0
        %v1152 = vadd.f32 0.0, %v1151
        %v1153 = vpop.f32.mrb[0].mxu0
        %1154 = vmatprep.mubr.bf16.mxu0 0
        %1155 = vmatmul.mubr.bf16.gmra.mrb[0].mxu0 %v1074
        %v1156 = vpop.f32.mrb[0].mxu0
        %v1157 = vadd.f32 0.0, %v1156
        %v1158 = vpop.f32.mrb[0].mxu0
        %v1159 = vpop.f32.mrb[0].mxu0
        %v1160 = vadd.f32 0.0, %v1159
        %v1161 = vpop.f32.mrb[0].mxu0
        %1162 = vmatprep.mubr.bf16.mxu0 0
        %1163 = vmatmul.mubr.bf16.gmra.mrb[0].mxu0 %v1077
        %v1164 = vpop.f32.mrb[0].mxu0
        %v1165 = vadd.f32 0.0, %v1164
        %v1166 = vpop.f32.mrb[0].mxu0
        %v1167 = vpop.f32.mrb[0].mxu0
        %v1168 = vadd.f32 0.0, %v1167
        %v1169 = vpop.f32.mrb[0].mxu0
        %1170 = vmatprep.mubr.bf16.mxu0 0
        %1171 = vmatmul.mubr.bf16.gmra.mrb[0].mxu0 %v1080
        %v1172 = vpop.f32.mrb[0].mxu0
        %v1173 = vadd.f32 0.0, %v1172
        %v1174 = vpop.f32.mrb[0].mxu0
        %v1175 = vpop.f32.mrb[0].mxu0
        %v1176 = vadd.f32 0.0, %v1175
        %v1177 = vpop.f32.mrb[0].mxu0
        %1178 = vdwg.mxu0
        %v1179 = vmax.f32 %v1117, 0.0
        %v1180 = vmax.f32 %v1120, 0.0
        %v1181 = vmax.f32 %v1125, 0.0
        %v1182 = vmax.f32 %v1128, 0.0
        %v1183 = vmax.f32 %v1133, 0.0
        %v1184 = vmax.f32 %v1136, 0.0
        %v1185 = vmax.f32 %v1141, 0.0
        %v1186 = vmax.f32 %v1144, 0.0
        %v1187 = vmax.f32 %v1149, 0.0
        %v1188 = vmax.f32 %v1152, 0.0
        %v1189 = vmax.f32 %v1157, 0.0
        %v1190 = vmax.f32 %v1160, 0.0
        %v1191 = vmax.f32 %v1165, 0.0
        %v1192 = vmax.f32 %v1168, 0.0
        %v1193 = vmax.f32 %v1173, 0.0
        %v1194 = vmax.f32 %v1176, 0.0
        %v1195 = vpack.c.bf16 %v1180, %v1179
        %v1196 = vpack.c.bf16 %v1182, %v1181
        %v1197 = vpack.c.bf16 %v1184, %v1183
        %v1198 = vpack.c.bf16 %v1186, %v1185
        %v1199 = vpack.c.bf16 %v1188, %v1187
        %v1200 = vpack.c.bf16 %v1190, %v1189
        %v1201 = vpack.c.bf16 %v1192, %v1191
        %v1202 = vpack.c.bf16 %v1194, %v1193
        %v1203 = vld [vmem:[%s6] sm:$0xf]
        %v1204 = vld [vmem:[%s6 + $0x4] sm:$0xf]
        %v1205 = vld [vmem:[%s6 + $0x8] sm:$0xf]
        %v1206 = vld [vmem:[%s6 + $0xc] sm:$0xf]
        %v1207 = vld [vmem:[%s6 + $0x10] sm:$0xf]
        %v1208 = vld [vmem:[%s6 + $0x14] sm:$0xf]
        %v1209 = vld [vmem:[%s6 + $0x18] sm:$0xf]
        %v1210 = vld [vmem:[%s6 + $0x1c] sm:$0xf]
        %s1211 = sld [smem:[#allocation2]]
        %v1212 = vstv %s1211
        %v1221 = vunpack.c.l.b16 %v1203
        %v1222 = vunpack.c.l.b16 %v1204
        %v1223 = vunpack.c.l.b16 %v1205
        %v1224 = vunpack.c.l.b16 %v1206
        %v1225 = vunpack.c.l.b16 %v1207
        %v1226 = vunpack.c.l.b16 %v1208
        %v1227 = vunpack.c.l.b16 %v1209
        %v1228 = vunpack.c.l.b16 %v1210
        %v1229 = vpack.c.b16 %v1222, %v1221
        %v1230 = vpack.c.b16 %v1224, %v1223
        %v1231 = vpack.c.b16 %v1226, %v1225
        %v1232 = vpack.c.b16 %v1228, %v1227
        %v1238 = vsel %vm397, %v1195, 0
        %v1241 = vsel %vm397, %v1196, 0
        %v1244 = vsel %vm397, %v1197, 0
        %v1247 = vsel %vm397, %v1198, 0
        %v1250 = vsel %vm397, %v1199, 0
        %v1253 = vsel %vm397, %v1200, 0
        %v1256 = vsel %vm397, %v1201, 0
        %v1259 = vsel %vm397, %v1202, 0
        %1261 = vmatprep.subr.bf16.mxu0 0
        %1262 = vmatpush1.bf16.msra.mxu0 %v1229
        %1263 = vmatprep.subr.bf16.mxu0 0
        %1264 = vmatpush1.bf16.msra.mxu0 %v1230
        %1265 = vmatprep.subr.bf16.mxu0 0
        %1266 = vmatpush1.bf16.msra.mxu0 %v1231
        %1267 = vmatprep.subr.bf16.mxu0 0
        %1268 = vmatpush1.bf16.msra.mxu0 %v1232
        %1269 = vmatprep.subr.bf16.mxu0 0
        %1270 = vmatpush1.bf16.msra.mxu0 0
        %1271 = vmatprep.subr.bf16.mxu0 0
        %1272 = vmatpush1.bf16.msra.mxu0 0
        %1273 = vmatprep.subr.bf16.mxu0 0
        %1274 = vmatpush1.bf16.msra.mxu0 0
        %1275 = vmatprep.subr.bf16.mxu0 0
        %1276 = vmatpush1.bf16.msra.mxu0 0
        %1277 = vmatprep.subr.bf16.mxu0 0
        %1278 = vmatpush1.bf16.msra.mxu0 0
        %1279 = vmatprep.subr.bf16.mxu0 0
        %1280 = vmatpush1.bf16.msra.mxu0 0
        %1281 = vmatprep.subr.bf16.mxu0 0
        %1282 = vmatpush1.bf16.msra.mxu0 0
        %1283 = vmatprep.subr.bf16.mxu0 0
        %1284 = vmatpush1.bf16.msra.mxu0 0
        %1285 = vmatprep.subr.bf16.mxu0 0
        %1286 = vmatpush1.bf16.msra.mxu0 0
        %1287 = vmatprep.subr.bf16.mxu0 0
        %1288 = vmatpush1.bf16.msra.mxu0 0
        %1289 = vmatprep.subr.bf16.mxu0 0
        %1290 = vmatpush1.bf16.msra.mxu0 0
        %1291 = vmatprep.subr.bf16.mxu0 0
        %1292 = vmatpush1.bf16.msra.mxu0 0
        %1293 = vmatprep.mubr.bf16.mxu0 0
        %1294 = vmatmul.mubr.bf16.gmra.mrb[0].mxu0 %v1238
        %v1295 = vpop.f32.mrb[0].mxu0
        %v1296 = vadd.f32 %v1212, %v1295
        %v1297 = vpop.f32.mrb[0].mxu0
        %v1298 = vpop.f32.mrb[0].mxu0
        %v1299 = vadd.f32 %v1212, %v1298
        %v1300 = vpop.f32.mrb[0].mxu0
        %1301 = vmatprep.mubr.bf16.mxu0 0
        %1302 = vmatmul.mubr.bf16.gmra.mrb[0].mxu0 %v1241
        %v1303 = vpop.f32.mrb[0].mxu0
        %v1304 = vadd.f32 %v1212, %v1303
        %v1305 = vpop.f32.mrb[0].mxu0
        %v1306 = vpop.f32.mrb[0].mxu0
        %v1307 = vadd.f32 %v1212, %v1306
        %v1308 = vpop.f32.mrb[0].mxu0
        %1309 = vmatprep.mubr.bf16.mxu0 0
        %1310 = vmatmul.mubr.bf16.gmra.mrb[0].mxu0 %v1244
        %v1311 = vpop.f32.mrb[0].mxu0
        %v1312 = vadd.f32 %v1212, %v1311
        %v1313 = vpop.f32.mrb[0].mxu0
        %v1314 = vpop.f32.mrb[0].mxu0
        %v1315 = vadd.f32 %v1212, %v1314
        %v1316 = vpop.f32.mrb[0].mxu0
        %1317 = vmatprep.mubr.bf16.mxu0 0
        %1318 = vmatmul.mubr.bf16.gmra.mrb[0].mxu0 %v1247
        %v1319 = vpop.f32.mrb[0].mxu0
        %v1320 = vadd.f32 %v1212, %v1319
        %v1321 = vpop.f32.mrb[0].mxu0
        %v1322 = vpop.f32.mrb[0].mxu0
        %v1323 = vadd.f32 %v1212, %v1322
        %v1324 = vpop.f32.mrb[0].mxu0
        %1325 = vmatprep.mubr.bf16.mxu0 0
        %1326 = vmatmul.mubr.bf16.gmra.mrb[0].mxu0 %v1250
        %v1327 = vpop.f32.mrb[0].mxu0
        %v1328 = vadd.f32 %v1212, %v1327
        %v1329 = vpop.f32.mrb[0].mxu0
        %v1330 = vpop.f32.mrb[0].mxu0
        %v1331 = vadd.f32 %v1212, %v1330
        %v1332 = vpop.f32.mrb[0].mxu0
        %1333 = vmatprep.mubr.bf16.mxu0 0
        %1334 = vmatmul.mubr.bf16.gmra.mrb[0].mxu0 %v1253
        %v1335 = vpop.f32.mrb[0].mxu0
        %v1336 = vadd.f32 %v1212, %v1335
        %v1337 = vpop.f32.mrb[0].mxu0
        %v1338 = vpop.f32.mrb[0].mxu0
        %v1339 = vadd.f32 %v1212, %v1338
        %v1340 = vpop.f32.mrb[0].mxu0
        %1341 = vmatprep.mubr.bf16.mxu0 0
        %1342 = vmatmul.mubr.bf16.gmra.mrb[0].mxu0 %v1256
        %v1343 = vpop.f32.mrb[0].mxu0
        %v1344 = vadd.f32 %v1212, %v1343
        %v1345 = vpop.f32.mrb[0].mxu0
        %v1346 = vpop.f32.mrb[0].mxu0
        %v1347 = vadd.f32 %v1212, %v1346
        %v1348 = vpop.f32.mrb[0].mxu0
        %1349 = vmatprep.mubr.bf16.mxu0 0
        %1350 = vmatmul.mubr.bf16.gmra.mrb[0].mxu0 %v1259
        %v1351 = vpop.f32.mrb[0].mxu0
        %v1352 = vadd.f32 %v1212, %v1351
        %v1353 = vpop.f32.mrb[0].mxu0
        %v1354 = vpop.f32.mrb[0].mxu0
        %v1355 = vadd.f32 %v1212, %v1354
        %v1356 = vpop.f32.mrb[0].mxu0
        %1357 = vdwg.mxu0
        %1358 = vst [vmem:[%s300] sm:$0xff] %v1296
        %1359 = vst [vmem:[%s300 + $0x8] sm:$0xff] %v1299
        %1360 = vst [vmem:[%s300 + $0x10] sm:$0xff] %v1304
        %1361 = vst [vmem:[%s300 + $0x18] sm:$0xff] %v1307
        %1362 = vst [vmem:[%s300 + $0x20] sm:$0xff] %v1312
        %1363 = vst [vmem:[%s300 + $0x28] sm:$0xff] %v1315
        %1364 = vst [vmem:[%s300 + $0x30] sm:$0xff] %v1320
        %1365 = vst [vmem:[%s300 + $0x38] sm:$0xff] %v1323
        %1366 = vst [vmem:[%s300 + $0x40] sm:$0xff] %v1328
        %1367 = vst [vmem:[%s300 + $0x48] sm:$0xff] %v1331
        %1368 = vst [vmem:[%s300 + $0x50] sm:$0xff] %v1336
        %1369 = vst [vmem:[%s300 + $0x58] sm:$0xff] %v1339
        %1370 = vst [vmem:[%s300 + $0x60] sm:$0xff] %v1344
        %1371 = vst [vmem:[%s300 + $0x68] sm:$0xff] %v1347
        %1372 = vst [vmem:[%s300 + $0x70] sm:$0xff] %v1352
        %1373 = vst [vmem:[%s300 + $0x78] sm:$0xff] %v1355
        %s1374 = sand.u32 %s204, 1
        %s1375 = scalar_lea.sflag [#allocation4], %s1374
        %s1376 = sand.u32 %s204, 1
        %s1377 = smul.addr %s1376, 128
        %s1378 = scalar_lea.vmem [#allocation3], %s1377
        // Predicated region
        $region53: #{tpu_custom_call.1} parent=51 // pred_check
          %p1379 = pneg %p214
        $region54: #{tpu_custom_call.1} parent=51 // pred_check_branch
          %1381 = sbr.rel (%p1379) target = $region56
        $region55: #{tpu_custom_call.1} parent=51 // pred_region
          %s1382 = smul.u32 16, %s23
          %s1384 = ssub.s32 2048, 2048
          %1385 = vsyncadd %s1375, %s1384
          %s1386 = smul.addr %s1382, 128
          %s1387 = scalar_lea.hbm %s8, %s1386
          %s1388 = sshll.u32 %s1378, 4
          %s1389 = int_to_ptr.vmem [resolvable:$true] %s1388
          %1394 = dma.vmem_to_hbm [thread:$0]  %s1389, 2048, %s1387, %s1375, 128, 128, 8
        $region56: #{tpu_custom_call.1} parent=51 // pred_fallthru
          _
      $region52: #{tpu_custom_call.1} parent=5 // pred_fallthru
        _
      %p1395 = scmp.le.s32.totalorder 2, %s18
      // Predicated region
      $region57: #{tpu_custom_call.1} parent=5 // pred_check
        %p1396 = pneg %p1395
      $region58: #{tpu_custom_call.1} parent=5 // pred_check_branch
        %1398 = sbr.rel (%p1396) target = $region60
      $region59: #{tpu_custom_call.1} parent=5 // pred_region
        %s1399 = ssub.s32 %s18, 2
        // Predicated region
        $region61: #{tpu_custom_call.1} parent=59 // pred_check
          %p1400 = pneg %p220
        $region62: #{tpu_custom_call.1} parent=59 // pred_check_branch
          %1402 = sbr.rel (%p1400) target = $region64
        $region63: #{tpu_custom_call.1} parent=59 // pred_region
          %s1403 = sand.u32 %s205, 1
          %s1404 = scalar_lea.sflag [#allocation4], %s1403
          %s1405 = sand.u32 %s205, 1
          %s1406 = smul.addr %s1405, 128
          %s1407 = scalar_lea.vmem [#allocation3], %s1406
          %1408 = dma.done %s1404, 2048
        $region64: #{tpu_custom_call.1} parent=59 // pred_fallthru
          _
      $region60: #{tpu_custom_call.1} parent=5 // pred_fallthru
        _
    $region6: #{tpu_custom_call.1} parent=1 // loop_footer
      %s22 = sadd.s32 1, %s18
    $region7: #{tpu_custom_call.1} parent=1 // loop_footer_branch
      %17 = sbr.rel target = $region3
    $region8: #{tpu_custom_call.1} parent=1 // loop_exit
      _
    %1409 = vsyncpa [#allocation4], 1
    %s1410 = scalar_lea.sflag [#allocation4], 1
    %1411 = vsyncpa %s1410, 1

</llo_original>
